<compile_context>
chip_gen: v7x
topology: tpu7x:2x2x1
jax: 0.10.0
libtpu: 0.0.40
codegen_flags: <defaults>
</compile_context>

<pallas_src>
import jax
import jax.numpy as jnp
from jax.experimental import pallas as pl
from jax.experimental.pallas import tpu as pltpu

NEGATIVE_SLOPE = -0.11143381
LANES = 128          # lane width of a vreg
MAX_TILE_R = 512     # 512*128*4B = 256 KiB per tile buffer (safe on v5e/v6e/v7x)


def _fused_kernel(w_ref, b_ref, x_ref, o_ref):
    # w_ref, b_ref are (1,) scalars in SMEM; x_ref/o_ref are (TILE_R, 128) VMEM tiles.
    w = w_ref[0]
    b = b_ref[0]
    v1 = x_ref[...] * w + b                       # 1x1 conv-transpose == affine
    # where(v1 > 0, v1, slope*v1) == max(v1,0) + slope*min(v1,0)
    o_ref[...] = jnp.maximum(v1, 0.0) + NEGATIVE_SLOPE * jnp.minimum(v1, 0.0)


def fused_convT_leaky(x_nchw, weight, bias):
    """x_nchw: (N, 1, H, W) float32; weight: (1,1,1,1); bias: (1,)."""
    n, c, h, w = x_nchw.shape
    assert c == 1, "ConvTranspose2d here has 1 in / 1 out channel"
    total = n * c * h * w

    w_s = weight.reshape(1).astype(jnp.float32)   # scalar kernel weight
    b_s = bias.reshape(1).astype(jnp.float32)

    # Lane-dense layout: flatten everything and view as (rows, 128).
    rows = pl.cdiv(total, LANES)
    if rows <= MAX_TILE_R:
        tile_r, grid_r = rows, 1                  # single full-extent block
    else:
        tile_r = MAX_TILE_R
        grid_r = pl.cdiv(rows, tile_r)
    padded_rows = grid_r * tile_r
    padded_total = padded_rows * LANES

    x_flat = x_nchw.reshape(-1).astype(jnp.float32)
    if padded_total != total:
        x_flat = jnp.pad(x_flat, (0, padded_total - total))
    x2d = x_flat.reshape(padded_rows, LANES)

    out2d = pl.pallas_call(
        _fused_kernel,
        out_shape=jax.ShapeDtypeStruct((padded_rows, LANES), jnp.float32),
        grid=(grid_r,),
        in_specs=[
            pl.BlockSpec(memory_space=pltpu.MemorySpace.SMEM),   # weight scalar
            pl.BlockSpec(memory_space=pltpu.MemorySpace.SMEM),   # bias scalar
            pl.BlockSpec((tile_r, LANES), lambda i: (i, 0)),     # lane-dense tile
        ],
        out_specs=pl.BlockSpec((tile_r, LANES), lambda i: (i, 0)),
        compiler_params=pltpu.CompilerParams(
            dimension_semantics=("parallel",)),
    )(w_s, b_s, x2d)

    out_flat = out2d.reshape(-1)[:total]
    return out_flat.reshape(n, c, h, w).astype(x_nchw.dtype)


def _reference(x, weight, bias):
    v1 = x * weight.reshape(()) + bias.reshape(())
    return jnp.where(v1 > 0, v1, v1 * NEGATIVE_SLOPE)


if __name__ == "__main__":
    key = jax.random.PRNGKey(0)
    kx, kw, kb, kx2 = jax.random.split(key, 4)

    # Shapes consistent with the module: C must be 1 for ConvTranspose2d(1, 1, 1).
    x = jax.random.normal(kx, (2, 1, 16, 16), dtype=jnp.float32)
    weight = jax.random.normal(kw, (1, 1, 1, 1), dtype=jnp.float32)
    bias = jax.random.normal(kb, (1,), dtype=jnp.float32)

    out = fused_convT_leaky(x, weight, bias)
    jax.block_until_ready(out)
    assert jnp.allclose(out, _reference(x, weight, bias), atol=1e-6, rtol=1e-6), \
        "mismatch vs reference (small input)"

    # Second check exercises the multi-tile / parallel-grid path.
    x_big = jax.random.normal(kx2, (4, 1, 256, 256), dtype=jnp.float32)
    out_big = fused_convT_leaky(x_big, weight, bias)
    jax.block_until_ready(out_big)
    assert jnp.allclose(out_big, _reference(x_big, weight, bias),
                        atol=1e-6, rtol=1e-6), "mismatch vs reference (tiled input)"

    print("KERNEL_OK")
</pallas_src>

<mosaic_0001>
module attributes {stable_mosaic.version = 11 : i64} {
  func.func @_fused_kernel(%arg0: i32, %arg1: memref<1xf32, #tpu.memory_space<smem>>, %arg2: memref<1xf32, #tpu.memory_space<smem>>, %arg3: memref<4x128xf32, #tpu.memory_space<vmem>>, %arg4: memref<4x128xf32, #tpu.memory_space<vmem>>) attributes {dimension_semantics = [#tpu.dimension_semantics<parallel>], iteration_bounds = array<i64: 1>, scalar_prefetch = 0 : i64, scratch_operands = 0 : i64, tpu.core_type = #tpu.core_type<tc>, window_params = [{transform_indices = @transform_0, window_bounds = array<i64: 1>}, {transform_indices = @transform_1, window_bounds = array<i64: 1>}, {transform_indices = @transform_2, window_bounds = array<i64: 4, 128>}, {transform_indices = @transform_3, window_bounds = array<i64: 4, 128>}]} {
    %c0 = arith.constant 0 : index
    %0 = memref.load %arg1[%c0] : memref<1xf32, #tpu.memory_space<smem>>
    %c0_0 = arith.constant 0 : index
    %1 = memref.load %arg2[%c0_0] : memref<1xf32, #tpu.memory_space<smem>>
    %c0_1 = arith.constant 0 : index
    %c0_2 = arith.constant 0 : index
    %2 = vector.load %arg3[%c0_1, %c0_2] : memref<4x128xf32, #tpu.memory_space<vmem>>, vector<4x128xf32>
    %3 = vector.broadcast %0 : f32 to vector<4x128xf32>
    %4 = arith.mulf %2, %3 : vector<4x128xf32>
    %5 = vector.broadcast %1 : f32 to vector<4x128xf32>
    %6 = arith.addf %4, %5 : vector<4x128xf32>
    %cst = arith.constant 0.000000e+00 : f32
    %7 = vector.broadcast %cst : f32 to vector<4x128xf32>
    %8 = arith.maximumf %6, %7 : vector<4x128xf32>
    %cst_3 = arith.constant 0.000000e+00 : f32
    %9 = vector.broadcast %cst_3 : f32 to vector<4x128xf32>
    %10 = arith.minimumf %6, %9 : vector<4x128xf32>
    %cst_4 = arith.constant -0.111433811 : f32
    %11 = vector.broadcast %cst_4 : f32 to vector<4x128xf32>
    %12 = arith.mulf %11, %10 : vector<4x128xf32>
    %13 = arith.addf %8, %12 : vector<4x128xf32>
    %c0_5 = arith.constant 0 : index
    %c0_6 = arith.constant 0 : index
    %14 = vector.load %arg4[%c0_5, %c0_6] : memref<4x128xf32, #tpu.memory_space<vmem>>, vector<4x128xf32>
    tpu.vector_store %arg4[%c0_5, %c0_6], %13 {strides = array<i32>} : memref<4x128xf32, #tpu.memory_space<vmem>>, vector<4x128xf32>,
    return
  }
  func.func @transform_0(%arg0: i32) -> i32 {
    %c0_i32 = arith.constant 0 : i32
    %c0_i32_0 = arith.constant 0 : i32
    return %c0_i32 : i32
  }
  func.func @transform_1(%arg0: i32) -> i32 {
    %c0_i32 = arith.constant 0 : i32
    %c0_i32_0 = arith.constant 0 : i32
    return %c0_i32 : i32
  }
  func.func @transform_2(%arg0: i32) -> (i32, i32) {
    %c0_i32 = arith.constant 0 : i32
    %c0_i32_0 = arith.constant 0 : i32
    return %arg0, %c0_i32 : i32, i32
  }
  func.func @transform_3(%arg0: i32) -> (i32, i32) {
    %c0_i32 = arith.constant 0 : i32
    %c0_i32_0 = arith.constant 0 : i32
    return %arg0, %c0_i32 : i32, i32
  }
}

</mosaic_0001>

<llo_original>
// kernel: tpu_custom_call.1
$region0: #{tpu_custom_call.1}
  #allocation0 [shape = 'u32[]', space=smem, size = 0x4, offset = 0x4, fixed_abs, tag = 'smem constant byte address 0x4 - core index']
  #allocation1 [shape = 'u32[144,128]{1,0:T(1,128)}', space=vmem, size = 0x12000, scoped, tag = 'internal scratch']
  #allocation2 [shape = 'f32[1]{0:T(128)S(6)}', space=smem, size = 0x200, scoped, tag = 'scoped memory for tpu_custom_call.1']
  #allocation3 [shape = 'f32[1]{0:T(128)S(6)}', space=smem, size = 0x200, scoped, tag = 'scoped memory for tpu_custom_call.1']
  %s0 = inlined_call_operand.<no memory space> [shape: f32[1], index: 0, kind: input, shape index: {}]
  %s1 = inlined_call_operand.<no memory space> [shape: f32[1], index: 1, kind: input, shape index: {}]
  %s2 = inlined_call_operand.vmem [shape: f32[4,128], index: 2, kind: input, shape index: {}]
  %s3 = inlined_call_operand.hbm [shape: f32[4,128], index: 3, kind: output, shape index: {}]
  %s4 = sld [smem:[#allocation0]]
  $region22: #{tpu_custom_call.1} parent=0
    _
  %s6 = ssub.s32 1, %s4
  %s7 = scalar_select 0, %s6, %s4
  %8 = sst [smem:[#allocation2]] %s0
  %9 = sst [smem:[#allocation3]] %s1
  $region1: #{tpu_custom_call.1} parent=0
    #allocation4 [shape = 'u8[2048]{0}', space=vmem, size = 0x800, scoped, tag = 'output window, operand 0, single buffered']
    #allocation5 [shape = 's32[1]{0}', space=sflag, size = 0x4, scoped, tag = 'scoped memory for tpu_custom_call.1']
    %10 = vsyncpa [#allocation5], 0
    // Predicated region
    $region2: #{tpu_custom_call.1} parent=1 // pred_check
      _
    $region3: #{tpu_custom_call.1} parent=1 // pred_check_branch
      %12 = sbr.rel (0) target = $region5
    $region4: #{tpu_custom_call.1} parent=1 // pred_region
      _
    $region5: #{tpu_custom_call.1} parent=1 // pred_fallthru
      _
    // Predicated region
    $region6: #{tpu_custom_call.1} parent=1 // pred_check
      _
    $region7: #{tpu_custom_call.1} parent=1 // pred_check_branch
      %14 = sbr.rel (0) target = $region9
    $region8: #{tpu_custom_call.1} parent=1 // pred_region
      _
    $region9: #{tpu_custom_call.1} parent=1 // pred_fallthru
      _
    // Predicated region
    $region10: #{tpu_custom_call.1} parent=1 // pred_check
      _
    $region11: #{tpu_custom_call.1} parent=1 // pred_check_branch
      %16 = sbr.rel (0) target = $region13
    $region12: #{tpu_custom_call.1} parent=1 // pred_region
      _
    $region13: #{tpu_custom_call.1} parent=1 // pred_fallthru
      _
    %s17 = sld [smem:[#allocation2]]
    %s18 = sld [smem:[#allocation3]]
    %v19 = vld [vmem:[%s2] sm:$0xf]
    %v20 = vstv %s17
    %v21 = vmul.f32 %v19, %v20
    %v22 = vstv %s18
    %v23 = vadd.f32 %v21, %v22
    %v24 = vmax.f32 %v23, 0.0
    %v25 = vmin.f32 %v23, 0.0
    %v26 = vmul.f32 %v25, -0.11143381
    %v27 = vadd.f32 %v24, %v26
    %28 = vst [vmem:[#allocation4] sm:$0xf] %v27
    // Predicated region
    $region14: #{tpu_custom_call.1} parent=1 // pred_check
      _
    $region15: #{tpu_custom_call.1} parent=1 // pred_check_branch
      %30 = sbr.rel (0) target = $region17
    $region16: #{tpu_custom_call.1} parent=1 // pred_region
      %s32 = ssub.s32 64, 64
      %33 = vsyncadd [#allocation5], %s32
      %s35 = sshll.u32 [#allocation4], 4
      %s36 = int_to_ptr.vmem [resolvable:$true] %s35
      %38 = dma.vmem_to_hbm [thread:$0]  %s36, 64, %s3, [#allocation5]
    $region17: #{tpu_custom_call.1} parent=1 // pred_fallthru
      _
    // Predicated region
    $region18: #{tpu_custom_call.1} parent=1 // pred_check
      _
    $region19: #{tpu_custom_call.1} parent=1 // pred_check_branch
      %40 = sbr.rel (0) target = $region21
    $region20: #{tpu_custom_call.1} parent=1 // pred_region
      %41 = dma.done [#allocation5], 64
    $region21: #{tpu_custom_call.1} parent=1 // pred_fallthru
      _
    %42 = vsyncpa [#allocation5], 1

</llo_original>
